<compile_context>
chip_gen: v7x
topology: tpu7x:2x2x1
jax: 0.10.0
libtpu: 0.0.40
codegen_flags: <defaults>
</compile_context>

<pallas_src>
import math

import numpy as np
import jax
import jax.numpy as jnp
from jax.experimental import pallas as pl
from jax.experimental.pallas import tpu as pltpu


def _cdiv(a, b):
    return -(-a // b)


def _round_up(a, b):
    return _cdiv(a, b) * b


def _xpos_kernel(x_ref, cos_ref, sin_e_ref, sin_o_ref, o_ref):
    # x_ref: (B, TL, Dp); tables: (TL, Dp) f32.
    xv = x_ref[...].astype(jnp.float32)   # compute in f32 (torch promotes too)
    Dp = xv.shape[-1]

    # rotate_every_two: out[..., 2j] = -x[..., 2j+1], out[..., 2j+1] = x[..., 2j]
    # Implemented with circular lane rolls; the even/odd select and the sign
    # live in the pre-masked sin tables, so no per-element iota/mod/where.
    # Wraparound lanes (0 via x_prev, Dp-1 via x_next) hit zeroed table lanes.
    x_next = pltpu.roll(xv, shift=Dp - 1, axis=2)   # x[..., (i+1) % Dp]
    x_prev = pltpu.roll(xv, shift=1, axis=2)        # x[..., (i-1) % Dp]

    out = (xv * cos_ref[...][None, :, :]
           + x_next * sin_e_ref[...][None, :, :]
           + x_prev * sin_o_ref[...][None, :, :])
    o_ref[...] = out.astype(o_ref.dtype)


def _vmem_capacity_bytes():
    """Per-core VMEM capacity; conservative (v7x-sized) if the query fails."""
    try:
        return int(pltpu.get_tpu_info().vmem_capacity_bytes)
    except Exception:
        return 64 << 20


def _choose_tiling(B, L, D, x_dtype):
    """Lane-dense packing factor g (padding L if needed) and sequence tile tl."""
    x_itemsize = jnp.dtype(x_dtype).itemsize

    # Smallest g with (g*D) % 128 == 0 -> lane-dense, unmasked stores.
    g = 1 if D % 128 == 0 else 128 // math.gcd(D, 128)
    Lpad = _round_up(L, g)          # pad L rather than fall back to lane-sparse
    Lp, Dp = Lpad // g, g * D

    # Sublane granularity: 2-byte dtypes pack 2 rows/sublane -> multiple of 16.
    sub = 16 if x_itemsize == 2 else 8

    bytes_per_row_x = B * Dp * x_itemsize      # one packed row of x (or out)
    bytes_per_row_tbl = 3 * Dp * 4             # cos + sin_e + sin_o, f32

    vmem_cap = _vmem_capacity_bytes()
    budget = int(0.6 * vmem_cap)               # double-buffered footprint budget

    def footprint(t):                          # 2x(in) + 2x(out) + 2x(3 tables)
        return 2 * (2 * t * bytes_per_row_x + t * bytes_per_row_tbl)

    if Lp <= sub:
        tl = Lp                                # full-extent block (allowed)
    else:
        # ~4 MiB of x per step: >=85% of HBM roofline, amortizes ~0.35us/step.
        tl = max(sub, ((4 << 20) // max(bytes_per_row_x, 1)) // sub * sub)
        # Clamp so the double-buffered footprint fits the VMEM budget (v7x).
        per_row_fp = 2 * (2 * bytes_per_row_x + bytes_per_row_tbl)
        tl_budget = max(sub, (budget // per_row_fp) // sub * sub)
        tl = min(tl, tl_budget)
        if tl >= Lp:
            tl = Lp                            # single whole-array step
        else:
            # v7x has 2 TensorCores: prefer an even "parallel" step count.
            steps = _cdiv(Lp, tl)
            if steps >= 2 and steps % 2 == 1:
                t2 = _round_up(_cdiv(Lp, steps + 1), sub)
                if sub <= t2 < Lp and _cdiv(Lp, t2) % 2 == 0 \
                        and footprint(t2) <= budget:
                    tl = t2

    needed = footprint(tl) + (4 << 20)         # headroom for Mosaic scratch
    vmem_limit = int(min(max(needed, 16 << 20), int(0.75 * vmem_cap)))
    return g, Lpad, Lp, Dp, tl, vmem_limit


def xpos_forward(x, scale_base=512, offset=0, downscale=False):
    """Pallas implementation of XPOS.forward(x, offset, downscale)."""
    B, L, D = x.shape
    assert D % 2 == 0, "head_dim must be even for XPOS"
    half = D // 2

    # --- glue: build the tables exactly like the PyTorch module (all f32) ---
    scale_buf = (jnp.arange(0, D, 2, dtype=jnp.float32) + 0.4 * D) / (1.4 * D)

    min_pos = -(L + offset) // 2          # Python floor division, as in torch
    max_pos = L + offset + min_pos
    expo = jnp.arange(min_pos, max_pos, dtype=jnp.float32) / float(scale_base)
    scale = scale_buf[None, :] ** expo[:, None]                 # (L+offset, half)

    # fixed_pos_embedding(scale)
    seq_len = scale.shape[0]
    inv_freq = 1.0 / (10000.0 ** (jnp.arange(0, half, dtype=jnp.float32) / half))
    sinusoid = jnp.arange(0, seq_len, dtype=jnp.float32)[:, None] * inv_freq[None, :]
    sin = jnp.sin(sinusoid)
    cos = jnp.cos(sinusoid)

    if seq_len > L:
        scale, sin, cos = scale[-L:], sin[-L:], cos[-L:]
    if downscale:
        scale = 1.0 / scale

    # duplicate_interleave(t * scale)  ->  (L, D)
    sin_dup = jnp.repeat(sin * scale, 2, axis=-1)
    cos_dup = jnp.repeat(cos * scale, 2, axis=-1).astype(jnp.float32)

    # Fold rotate_every_two's even/odd select and sign into two sin tables.
    even = (jnp.arange(D) % 2) == 0
    sin_e = jnp.where(even[None, :], -sin_dup, 0.0).astype(jnp.float32)
    sin_o = jnp.where(even[None, :], 0.0, sin_dup).astype(jnp.float32)

    # --- lane-dense packing (pad L when needed) + generation-aware tiling ---
    g, Lpad, Lp, Dp, tl, vmem_limit = _choose_tiling(B, L, D, x.dtype)
    x_in = x
    if Lpad != L:
        pad = Lpad - L
        x_in = jnp.pad(x_in, ((0, 0), (0, pad), (0, 0)))
        cos_dup = jnp.pad(cos_dup, ((0, pad), (0, 0)))
        sin_e = jnp.pad(sin_e, ((0, pad), (0, 0)))
        sin_o = jnp.pad(sin_o, ((0, pad), (0, 0)))

    x_p = x_in.reshape(B, Lp, Dp)          # free, contiguous reshape
    cos_p = cos_dup.reshape(Lp, Dp)
    sin_e_p = sin_e.reshape(Lp, Dp)
    sin_o_p = sin_o.reshape(Lp, Dp)

    grid = (_cdiv(Lp, tl),)                # partial last block is allowed

    x_itemsize = jnp.dtype(x.dtype).itemsize
    n_elem = B * Lpad * D
    cost = pl.CostEstimate(
        flops=5 * n_elem,
        transcendentals=0,
        bytes_accessed=2 * n_elem * x_itemsize + 3 * Lpad * D * 4,
    )

    out = pl.pallas_call(
        _xpos_kernel,
        out_shape=jax.ShapeDtypeStruct((B, Lp, Dp), x.dtype),
        grid_spec=pltpu.PrefetchScalarGridSpec(
            num_scalar_prefetch=0,
            grid=grid,
            in_specs=[
                pl.BlockSpec((B, tl, Dp), lambda i: (0, i, 0)),
                pl.BlockSpec((tl, Dp), lambda i: (i, 0)),
                pl.BlockSpec((tl, Dp), lambda i: (i, 0)),
                pl.BlockSpec((tl, Dp), lambda i: (i, 0)),
            ],
            out_specs=pl.BlockSpec((B, tl, Dp), lambda i: (0, i, 0)),
        ),
        compiler_params=pltpu.CompilerParams(
            dimension_semantics=("parallel",),
            vmem_limit_bytes=vmem_limit,
        ),
        cost_estimate=cost,
    )(x_p, cos_p, sin_e_p, sin_o_p)

    out = out.reshape(B, Lpad, D)
    if Lpad != L:
        out = out[:, :L, :]
    return out


def _xpos_reference(x, scale_base=512, offset=0, downscale=False):
    """Pure-JAX reference mirroring the PyTorch code, for a sanity check."""
    B, L, D = x.shape
    half = D // 2
    scale_buf = (jnp.arange(0, D, 2, dtype=jnp.float32) + 0.4 * D) / (1.4 * D)
    min_pos = -(L + offset) // 2
    max_pos = L + offset + min_pos
    expo = jnp.arange(min_pos, max_pos, dtype=jnp.float32) / float(scale_base)
    scale = scale_buf[None, :] ** expo[:, None]
    seq_len = scale.shape[0]
    inv_freq = 1.0 / (10000.0 ** (jnp.arange(0, half, dtype=jnp.float32) / half))
    sinusoid = jnp.arange(0, seq_len, dtype=jnp.float32)[:, None] * inv_freq[None, :]
    sin, cos = jnp.sin(sinusoid), jnp.cos(sinusoid)
    if seq_len > L:
        scale, sin, cos = scale[-L:], sin[-L:], cos[-L:]
    if downscale:
        scale = 1.0 / scale
    sin_d = jnp.repeat(sin * scale, 2, axis=-1)
    cos_d = jnp.repeat(cos * scale, 2, axis=-1)
    x1 = x[:, :, ::2]
    x2 = x[:, :, 1::2]
    rot = jnp.stack((-x2, x1), axis=-1).reshape(B, L, D)
    return x * cos_d[None] + rot * sin_d[None]


if __name__ == "__main__":
    key = jax.random.PRNGKey(0)
    B, L, D = 2, 16, 32          # batch, seq, head_dim
    x = jax.random.normal(key, (B, L, D), dtype=jnp.float32)

    # f32, default args
    out = jax.block_until_ready(xpos_forward(x, scale_base=512, offset=0, downscale=False))
    ref = _xpos_reference(x, scale_base=512, offset=0, downscale=False)
    np.testing.assert_allclose(np.asarray(out), np.asarray(ref), rtol=1e-5, atol=1e-5)

    # f32, offset + downscale (exercises the slicing / inverse-scale path)
    out2 = jax.block_until_ready(xpos_forward(x, scale_base=512, offset=4, downscale=True))
    ref2 = _xpos_reference(x, scale_base=512, offset=4, downscale=True)
    np.testing.assert_allclose(np.asarray(out2), np.asarray(ref2), rtol=1e-5, atol=1e-5)

    # odd sequence length (exercises the lane-dense L-padding path)
    L3 = 13
    x3 = jax.random.normal(jax.random.PRNGKey(1), (B, L3, D), dtype=jnp.float32)
    out3 = jax.block_until_ready(xpos_forward(x3))
    ref3 = _xpos_reference(x3)
    np.testing.assert_allclose(np.asarray(out3), np.asarray(ref3), rtol=1e-5, atol=1e-5)

    # bf16 path (f32 tables + in-kernel f32 compute, bf16 store)
    x_bf16 = x.astype(jnp.bfloat16)
    out_bf = jax.block_until_ready(xpos_forward(x_bf16))
    ref_bf = _xpos_reference(x_bf16.astype(jnp.float32))
    np.testing.assert_allclose(np.asarray(out_bf).astype(np.float32),
                               np.asarray(ref_bf), rtol=2e-2, atol=2e-2)

    print("KERNEL_OK")
</pallas_src>

<mosaic_0001>
module attributes {stable_mosaic.version = 11 : i64} {
  func.func @_xpos_kernel(%arg0: i32, %arg1: memref<2x4x128xf32, #tpu.memory_space<vmem>>, %arg2: memref<4x128xf32, #tpu.memory_space<vmem>>, %arg3: memref<4x128xf32, #tpu.memory_space<vmem>>, %arg4: memref<4x128xf32, #tpu.memory_space<vmem>>, %arg5: memref<2x4x128xf32, #tpu.memory_space<vmem>>) attributes {dimension_semantics = [#tpu.dimension_semantics<parallel>], iteration_bounds = array<i64: 1>, scalar_prefetch = 0 : i64, scratch_operands = 0 : i64, tpu.core_type = #tpu.core_type<tc>, window_params = [{transform_indices = @transform_0, window_bounds = array<i64: 2, 4, 128>}, {transform_indices = @transform_1, window_bounds = array<i64: 4, 128>}, {transform_indices = @transform_2, window_bounds = array<i64: 4, 128>}, {transform_indices = @transform_3, window_bounds = array<i64: 4, 128>}, {transform_indices = @transform_4, window_bounds = array<i64: 2, 4, 128>}]} {
    %c0 = arith.constant 0 : index
    %c0_0 = arith.constant 0 : index
    %c0_1 = arith.constant 0 : index
    %0 = vector.load %arg1[%c0, %c0_0, %c0_1] : memref<2x4x128xf32, #tpu.memory_space<vmem>>, vector<2x4x128xf32>
    %c127_i32 = arith.constant 127 : i32
    %1 = tpu.dynamic_rotate %0 by %c127_i32 dim 2 : vector<2x4x128xf32>, i32 -> vector<2x4x128xf32>
    %c1_i32 = arith.constant 1 : i32
    %2 = tpu.dynamic_rotate %0 by %c1_i32 dim 2 : vector<2x4x128xf32>, i32 -> vector<2x4x128xf32>
    %c0_2 = arith.constant 0 : index
    %c0_3 = arith.constant 0 : index
    %3 = vector.load %arg2[%c0_2, %c0_3] : memref<4x128xf32, #tpu.memory_space<vmem>>, vector<4x128xf32>
    %4 = vector.shape_cast %3 : vector<4x128xf32> to vector<1x4x128xf32>
    %5 = vector.broadcast %4 : vector<1x4x128xf32> to vector<2x4x128xf32>
    %6 = arith.mulf %0, %5 : vector<2x4x128xf32>
    %c0_4 = arith.constant 0 : index
    %c0_5 = arith.constant 0 : index
    %7 = vector.load %arg3[%c0_4, %c0_5] : memref<4x128xf32, #tpu.memory_space<vmem>>, vector<4x128xf32>
    %8 = vector.shape_cast %7 : vector<4x128xf32> to vector<1x4x128xf32>
    %9 = vector.broadcast %8 : vector<1x4x128xf32> to vector<2x4x128xf32>
    %10 = arith.mulf %1, %9 : vector<2x4x128xf32>
    %11 = arith.addf %6, %10 : vector<2x4x128xf32>
    %c0_6 = arith.constant 0 : index
    %c0_7 = arith.constant 0 : index
    %12 = vector.load %arg4[%c0_6, %c0_7] : memref<4x128xf32, #tpu.memory_space<vmem>>, vector<4x128xf32>
    %13 = vector.shape_cast %12 : vector<4x128xf32> to vector<1x4x128xf32>
    %14 = vector.broadcast %13 : vector<1x4x128xf32> to vector<2x4x128xf32>
    %15 = arith.mulf %2, %14 : vector<2x4x128xf32>
    %16 = arith.addf %11, %15 : vector<2x4x128xf32>
    %c0_8 = arith.constant 0 : index
    %c0_9 = arith.constant 0 : index
    %c0_10 = arith.constant 0 : index
    %17 = vector.load %arg5[%c0_8, %c0_9, %c0_10] : memref<2x4x128xf32, #tpu.memory_space<vmem>>, vector<2x4x128xf32>
    tpu.vector_store %arg5[%c0_8, %c0_9, %c0_10], %16 {strides = array<i32>} : memref<2x4x128xf32, #tpu.memory_space<vmem>>, vector<2x4x128xf32>,
    return
  }
  func.func @transform_0(%arg0: i32) -> (i32, i32, i32) {
    %c0_i32 = arith.constant 0 : i32
    %c0_i32_0 = arith.constant 0 : i32
    %c0_i32_1 = arith.constant 0 : i32
    return %c0_i32, %arg0, %c0_i32_0 : i32, i32, i32
  }
  func.func @transform_1(%arg0: i32) -> (i32, i32) {
    %c0_i32 = arith.constant 0 : i32
    %c0_i32_0 = arith.constant 0 : i32
    return %arg0, %c0_i32 : i32, i32
  }
  func.func @transform_2(%arg0: i32) -> (i32, i32) {
    %c0_i32 = arith.constant 0 : i32
    %c0_i32_0 = arith.constant 0 : i32
    return %arg0, %c0_i32 : i32, i32
  }
  func.func @transform_3(%arg0: i32) -> (i32, i32) {
    %c0_i32 = arith.constant 0 : i32
    %c0_i32_0 = arith.constant 0 : i32
    return %arg0, %c0_i32 : i32, i32
  }
  func.func @transform_4(%arg0: i32) -> (i32, i32, i32) {
    %c0_i32 = arith.constant 0 : i32
    %c0_i32_0 = arith.constant 0 : i32
    %c0_i32_1 = arith.constant 0 : i32
    return %c0_i32, %arg0, %c0_i32_0 : i32, i32, i32
  }
}

</mosaic_0001>

<llo_original>
// kernel: tpu_custom_call.1
$region0: #{tpu_custom_call.1}
  #allocation0 [shape = 'u32[]', space=smem, size = 0x4, offset = 0x4, fixed_abs, tag = 'smem constant byte address 0x4 - core index']
  #allocation1 [shape = 'u32[144,128]{1,0:T(1,128)}', space=vmem, size = 0x12000, scoped, tag = 'internal scratch']
  %s0 = inlined_call_operand.hbm [shape: f32[2,4,128], index: 0, kind: input, shape index: {}]
  %s1 = inlined_call_operand.hbm [shape: f32[4,128], index: 1, kind: input, shape index: {}]
  %s2 = inlined_call_operand.vmem [shape: f32[4,128], index: 2, kind: input, shape index: {}]
  %s3 = inlined_call_operand.vmem [shape: f32[4,128], index: 3, kind: input, shape index: {}]
  %s4 = inlined_call_operand.hbm [shape: f32[2,4,128], index: 4, kind: output, shape index: {}]
  %s5 = sld [smem:[#allocation0]]
  $region34: #{tpu_custom_call.1} parent=0
    _
  %s7 = ssub.s32 1, %s5
  %s8 = scalar_select 0, %s7, %s5
  $region1: #{tpu_custom_call.1} parent=0
    #allocation2 [shape = 'u8[4096]{0}', space=vmem, size = 0x1000, scoped, tag = 'input window, operand 0, single buffered']
    #allocation3 [shape = 's32[1]{0}', space=sflag, size = 0x4, scoped, tag = 'scoped memory for tpu_custom_call.1']
    #allocation4 [shape = 's32[1]{0}', space=sflag, size = 0x4, scoped, tag = 'scoped memory for tpu_custom_call.1']
    #allocation5 [shape = 'u8[2048]{0}', space=vmem, size = 0x800, scoped, tag = 'input window, operand 1, single buffered']
    #allocation6 [shape = 's32[1]{0}', space=sflag, size = 0x4, scoped, tag = 'scoped memory for tpu_custom_call.1']
    #allocation7 [shape = 'u8[4096]{0}', space=vmem, size = 0x1000, scoped, tag = 'output window, operand 0, single buffered']
    %9 = vsyncpa [#allocation3], 0
    %10 = vsyncpa [#allocation6], 0
    %11 = vsyncpa [#allocation4], 0
    // Predicated region
    $region2: #{tpu_custom_call.1} parent=1 // pred_check
      _
    $region3: #{tpu_custom_call.1} parent=1 // pred_check_branch
      %13 = sbr.rel (0) target = $region5
    $region4: #{tpu_custom_call.1} parent=1 // pred_region
      %s15 = ssub.s32 128, 128
      %16 = vsyncadd [#allocation3], %s15
      %s17 = sshll.u32 [#allocation2], 4
      %s18 = int_to_ptr.vmem [resolvable:$true] %s17
      %23 = dma.hbm_to_vmem [thread:$0]  %s0, 128, %s18, [#allocation3], 64, 64, 4
    $region5: #{tpu_custom_call.1} parent=1 // pred_fallthru
      _
    // Predicated region
    $region6: #{tpu_custom_call.1} parent=1 // pred_check
      _
    $region7: #{tpu_custom_call.1} parent=1 // pred_check_branch
      %25 = sbr.rel (0) target = $region9
    $region8: #{tpu_custom_call.1} parent=1 // pred_region
      %s27 = ssub.s32 64, 64
      %28 = vsyncadd [#allocation6], %s27
      %s30 = sshll.u32 [#allocation5], 4
      %s31 = int_to_ptr.vmem [resolvable:$true] %s30
      %33 = dma.hbm_to_vmem [thread:$0]  %s1, 64, %s31, [#allocation6]
    $region9: #{tpu_custom_call.1} parent=1 // pred_fallthru
      _
    // Predicated region
    $region10: #{tpu_custom_call.1} parent=1 // pred_check
      _
    $region11: #{tpu_custom_call.1} parent=1 // pred_check_branch
      %35 = sbr.rel (0) target = $region13
    $region12: #{tpu_custom_call.1} parent=1 // pred_region
      _
    $region13: #{tpu_custom_call.1} parent=1 // pred_fallthru
      _
    // Predicated region
    $region14: #{tpu_custom_call.1} parent=1 // pred_check
      _
    $region15: #{tpu_custom_call.1} parent=1 // pred_check_branch
      %37 = sbr.rel (0) target = $region17
    $region16: #{tpu_custom_call.1} parent=1 // pred_region
      _
    $region17: #{tpu_custom_call.1} parent=1 // pred_fallthru
      _
    // Predicated region
    $region18: #{tpu_custom_call.1} parent=1 // pred_check
      _
    $region19: #{tpu_custom_call.1} parent=1 // pred_check_branch
      %39 = sbr.rel (0) target = $region21
    $region20: #{tpu_custom_call.1} parent=1 // pred_region
      %40 = dma.done [#allocation3], 128
    $region21: #{tpu_custom_call.1} parent=1 // pred_fallthru
      _
    // Predicated region
    $region22: #{tpu_custom_call.1} parent=1 // pred_check
      _
    $region23: #{tpu_custom_call.1} parent=1 // pred_check_branch
      %42 = sbr.rel (0) target = $region25
    $region24: #{tpu_custom_call.1} parent=1 // pred_region
      %43 = dma.done [#allocation6], 64
    $region25: #{tpu_custom_call.1} parent=1 // pred_fallthru
      _
    %v44 = vld [vmem:[#allocation2] sm:$0xf]
    %v45 = vld [vmem:[#allocation2 + $0x4] sm:$0xf]
    %46 = vrot.lane.b32.xlu0 %v44, 127
    %v47 = vpop.permute.xlu0 %46
    %48 = vrot.lane.b32.xlu0 %v45, 127
    %v49 = vpop.permute.xlu0 %48
    %50 = vrot.lane.b32.xlu0 %v44, 1
    %v51 = vpop.permute.xlu0 %50
    %52 = vrot.lane.b32.xlu0 %v45, 1
    %v53 = vpop.permute.xlu0 %52
    %v54 = vld [vmem:[#allocation5] sm:$0xf]
    %v55 = vmul.f32 %v44, %v54
    %v56 = vmul.f32 %v45, %v54
    %v57 = vld [vmem:[%s2] sm:$0xf]
    %v58 = vmul.f32 %v47, %v57
    %v59 = vmul.f32 %v49, %v57
    %v60 = vadd.f32 %v55, %v58
    %v61 = vadd.f32 %v56, %v59
    %v62 = vld [vmem:[%s3] sm:$0xf]
    %v63 = vmul.f32 %v51, %v62
    %v64 = vmul.f32 %v53, %v62
    %v65 = vadd.f32 %v60, %v63
    %v66 = vadd.f32 %v61, %v64
    %67 = vst [vmem:[#allocation7] sm:$0xf] %v65
    %68 = vst [vmem:[#allocation7 + $0x4] sm:$0xf] %v66
    // Predicated region
    $region26: #{tpu_custom_call.1} parent=1 // pred_check
      _
    $region27: #{tpu_custom_call.1} parent=1 // pred_check_branch
      %70 = sbr.rel (0) target = $region29
    $region28: #{tpu_custom_call.1} parent=1 // pred_region
      %s72 = ssub.s32 128, 128
      %73 = vsyncadd [#allocation4], %s72
      %s74 = sshll.u32 [#allocation7], 4
      %s75 = int_to_ptr.vmem [resolvable:$true] %s74
      %80 = dma.vmem_to_hbm [thread:$0]  %s75, 128, %s4, [#allocation4], 64, 64, 4
    $region29: #{tpu_custom_call.1} parent=1 // pred_fallthru
      _
    // Predicated region
    $region30: #{tpu_custom_call.1} parent=1 // pred_check
      _
    $region31: #{tpu_custom_call.1} parent=1 // pred_check_branch
      %82 = sbr.rel (0) target = $region33
    $region32: #{tpu_custom_call.1} parent=1 // pred_region
      %83 = dma.done [#allocation4], 128
    $region33: #{tpu_custom_call.1} parent=1 // pred_fallthru
      _
    %84 = vsyncpa [#allocation3], 1
    %85 = vsyncpa [#allocation6], 1
    %86 = vsyncpa [#allocation4], 1

</llo_original>
